<compile_context>
chip_gen: v7x
topology: tpu7x:2x2x1
jax: 0.10.0
libtpu: 0.0.40
codegen_flags: <defaults>
</compile_context>

<pallas_src>
import functools

import jax
import jax.numpy as jnp
from jax.experimental import pallas as pl
from jax.experimental.pallas import tpu as pltpu

EPS = 1e-12  # matches torch.nn.functional.normalize default eps


def _round_up(x, m):
    return (x + m - 1) // m * m


def _linear_softmax_kernel(xn_ref, w_ref, out_ref, *, k, tile_c):
    # xn_ref : (TB, D)            bf16, already L2-normalized
    # w_ref  : (K, tile_c, D)     bf16, already L2-normalized and pre-multiplied by `scale`
    # out_ref: (TB, tile_c)
    d = w_ref.shape[-1]
    xn = xn_ref[...]
    # Fuse K sub-centers into one wide MXU matmul (layout-preserving merge: tile_c % 8 == 0).
    w = w_ref[...].reshape(k * tile_c, d)
    s = jax.lax.dot_general(
        xn, w, (((1,), (1,)), ((), ())),
        preferred_element_type=jnp.float32)                     # (TB, K*tile_c) f32 accumulate

    # max over K sub-centers via lane-aligned static slices
    acc = s[:, :tile_c]
    for j in range(1, k):                                       # static, small K
        acc = jnp.maximum(acc, s[:, j * tile_c:(j + 1) * tile_c])

    out_ref[...] = acc.astype(out_ref.dtype)                    # scale already folded into w


def linear_softmax(x, weight, targets=None, *, scale=30, block_b=128, block_c=256,
                   compute_dtype=jnp.bfloat16):
    """x: (B, D), weight: (K, C, D) = (sub_centers, out_features, in_features).

    Returns (scaled_logits, scaled_logits), matching the torch forward's tuple.
    """
    del targets  # forward() accepts targets but never uses them
    B, D = x.shape
    K, C, _ = weight.shape
    out_dtype = x.dtype

    # ---- one-time preprocessing (plain XLA, outside the kernel) ----
    x32 = x.astype(jnp.float32)
    xn = x32 / jnp.maximum(jnp.linalg.norm(x32, axis=-1, keepdims=True), EPS)
    xn = xn.astype(compute_dtype)

    w32 = weight.astype(jnp.float32)
    wn = w32 / jnp.maximum(jnp.linalg.norm(w32, axis=-1, keepdims=True), EPS)
    fold_scale = scale > 0                     # max(scale*cos) == scale*max(cos) only for scale > 0
    w_kern = (wn * (float(scale) if fold_scale else 1.0)).astype(compute_dtype)

    # ---- tile sizes + padding (ragged B and C < multiple of 128 both handled) ----
    block_b = min(block_b, _round_up(B, 8))
    block_c = min(block_c, _round_up(C, 128))
    Bp, Cp = _round_up(B, block_b), _round_up(C, block_c)
    if Bp != B:
        xn = jnp.pad(xn, ((0, Bp - B), (0, 0)))
    if Cp != C:
        w_kern = jnp.pad(w_kern, ((0, 0), (0, Cp - C), (0, 0)))

    # Explicit VMEM budget (double-buffered tiles) so tiling also fits v7x's smaller VMEM.
    itemsize = jnp.dtype(compute_dtype).itemsize
    vmem_needed = 2 * (K * block_c * D * itemsize               # weight tile
                       + block_b * D * itemsize                 # x tile
                       + block_b * block_c * jnp.dtype(out_dtype).itemsize)  # output tile
    vmem_needed += block_b * K * block_c * 4                    # wide matmul intermediate
    vmem_limit = int(max(vmem_needed + (4 << 20), 32 << 20))

    kern = functools.partial(_linear_softmax_kernel, k=K, tile_c=block_c)

    out = pl.pallas_call(
        kern,
        out_shape=jax.ShapeDtypeStruct((Bp, Cp), out_dtype),
        grid_spec=pltpu.PrefetchScalarGridSpec(
            num_scalar_prefetch=0,
            # C outermost, B innermost: the weight block index is constant across the inner
            # b loop, so each (large) weight tile is DMA'd from HBM exactly once.
            grid=(Cp // block_c, Bp // block_b),
            in_specs=[
                pl.BlockSpec((block_b, D), lambda c, b: (b, 0)),        # batch tile of xn
                pl.BlockSpec((K, block_c, D), lambda c, b: (0, c, 0)),  # class tile of W
            ],
            out_specs=pl.BlockSpec((block_b, block_c), lambda c, b: (b, c)),
        ),
        compiler_params=pltpu.CompilerParams(
            dimension_semantics=("parallel", "parallel"),
            vmem_limit_bytes=vmem_limit),
    )(xn, w_kern)

    out = out[:B, :C]
    if not fold_scale:
        out = out * scale
    # Torch forward returns two (identical-valued) tensors; duplicate in the wrapper
    # instead of writing the output twice from the kernel.
    return out, out


def _reference(x, weight, scale):
    # pure-JAX reference for verification
    xn = x / jnp.maximum(jnp.linalg.norm(x, axis=-1, keepdims=True), EPS)
    wn = weight / jnp.maximum(jnp.linalg.norm(weight, axis=-1, keepdims=True), EPS)
    cos = jnp.einsum("bd,kcd->bkc", xn, wn)          # (B, K, C)
    logits = jnp.max(cos, axis=1) * scale            # max over sub-centers
    return logits, logits


if __name__ == "__main__":
    # small deterministic setup; B=20 (ragged vs. tile) and C=16 (<128) exercise padding
    B, D, C, K = 20, 128, 16, 2
    SCALE = 30

    key = jax.random.PRNGKey(0)
    kx, kw, kt = jax.random.split(key, 3)

    x = jax.random.normal(kx, (B, D), dtype=jnp.float32)
    # xavier_uniform init for a (C*K, D) weight, stored as (K, C, D)
    bound = (6.0 / (D + C * K)) ** 0.5
    weight = jax.random.uniform(kw, (K, C, D), dtype=jnp.float32,
                                minval=-bound, maxval=bound)
    targets = jax.random.randint(kt, (B,), 0, C)     # present but unused by forward
    # TODO(synk): `margin` of the torch module never affects forward(); nothing to port.

    out_a, out_b = linear_softmax(x, weight, targets, scale=SCALE)
    jax.block_until_ready((out_a, out_b))

    ref_a, ref_b = _reference(x, weight, SCALE)
    assert out_a.shape == (B, C) and out_b.shape == (B, C)
    # bf16 MXU operands (f32 accumulation): cosine abs error <~1e-2, scaled by 30.
    assert jnp.allclose(out_a, ref_a, atol=0.35, rtol=2e-2)
    assert jnp.allclose(out_b, ref_b, atol=0.35, rtol=2e-2)

    print("KERNEL_OK")
</pallas_src>

<mosaic_0001>
module attributes {stable_mosaic.version = 11 : i64} {
  func.func @_linear_softmax_kernel(%arg0: i32, %arg1: i32, %arg2: memref<24x128xbf16, #tpu.memory_space<vmem>>, %arg3: memref<2x128x128xbf16, #tpu.memory_space<vmem>>, %arg4: memref<24x128xf32, #tpu.memory_space<vmem>>) attributes {dimension_semantics = [#tpu.dimension_semantics<parallel>, #tpu.dimension_semantics<parallel>], iteration_bounds = array<i64: 1, 1>, scalar_prefetch = 0 : i64, scratch_operands = 0 : i64, tpu.core_type = #tpu.core_type<tc>, window_params = [{transform_indices = @transform_0, window_bounds = array<i64: 24, 128>}, {transform_indices = @transform_1, window_bounds = array<i64: 2, 128, 128>}, {transform_indices = @transform_2, window_bounds = array<i64: 24, 128>}]} {
    %c0 = arith.constant 0 : index
    %c0_0 = arith.constant 0 : index
    %0 = vector.load %arg2[%c0, %c0_0] : memref<24x128xbf16, #tpu.memory_space<vmem>>, vector<24x128xbf16>
    %c0_1 = arith.constant 0 : index
    %c0_2 = arith.constant 0 : index
    %c0_3 = arith.constant 0 : index
    %1 = vector.load %arg3[%c0_1, %c0_2, %c0_3] : memref<2x128x128xbf16, #tpu.memory_space<vmem>>, vector<2x128x128xbf16>
    %2 = vector.shape_cast %1 : vector<2x128x128xbf16> to vector<256x128xbf16>
    %cst = arith.constant dense<0.000000e+00> : vector<24x256xf32>
    %3 = tpu.matmul %0, %2, %cst {dimension_numbers = #tpu.dot_dimension_numbers<[1], [1], [0], [0], [0, 0, 1, 0], [], []>} : vector<24x128xbf16>, vector<256x128xbf16>, vector<24x256xf32> -> vector<24x256xf32>
    %4 = vector.extract_strided_slice %3 {offsets = [0, 0], sizes = [24, 128], strides = [1, 1]} : vector<24x256xf32> to vector<24x128xf32>
    %5 = vector.extract_strided_slice %3 {offsets = [0, 128], sizes = [24, 128], strides = [1, 1]} : vector<24x256xf32> to vector<24x128xf32>
    %6 = arith.maximumf %4, %5 : vector<24x128xf32>
    %c0_4 = arith.constant 0 : index
    %c0_5 = arith.constant 0 : index
    %7 = vector.load %arg4[%c0_4, %c0_5] : memref<24x128xf32, #tpu.memory_space<vmem>>, vector<24x128xf32>
    tpu.vector_store %arg4[%c0_4, %c0_5], %6 {strides = array<i32>} : memref<24x128xf32, #tpu.memory_space<vmem>>, vector<24x128xf32>,
    return
  }
  func.func @transform_0(%arg0: i32, %arg1: i32) -> (i32, i32) {
    %c0_i32 = arith.constant 0 : i32
    %c0_i32_0 = arith.constant 0 : i32
    return %arg1, %c0_i32 : i32, i32
  }
  func.func @transform_1(%arg0: i32, %arg1: i32) -> (i32, i32, i32) {
    %c0_i32 = arith.constant 0 : i32
    %c0_i32_0 = arith.constant 0 : i32
    %c0_i32_1 = arith.constant 0 : i32
    return %c0_i32, %arg0, %c0_i32_0 : i32, i32, i32
  }
  func.func @transform_2(%arg0: i32, %arg1: i32) -> (i32, i32) {
    %c0_i32 = arith.constant 0 : i32
    return %arg1, %arg0 : i32, i32
  }
}

</mosaic_0001>

<llo_original>
// kernel: tpu_custom_call.1
$region0: #{tpu_custom_call.1}
  #allocation0 [shape = 'u32[]', space=smem, size = 0x4, offset = 0x4, fixed_abs, tag = 'smem constant byte address 0x4 - core index']
  #allocation1 [shape = 'u32[144,128]{1,0:T(1,128)}', space=vmem, size = 0x12000, scoped, tag = 'internal scratch']
  %s0 = inlined_call_operand.hbm [shape: bf16[24,128], index: 0, kind: input, shape index: {}]
  %s1 = inlined_call_operand.hbm [shape: bf16[2,128,128], index: 1, kind: input, shape index: {}]
  %s2 = inlined_call_operand.hbm [shape: f32[24,128], index: 2, kind: output, shape index: {}]
  %s3 = sld [smem:[#allocation0]]
  $region26: #{tpu_custom_call.1} parent=0
    _
  %s5 = ssub.s32 1, %s3
  %s6 = scalar_select 0, %s5, %s3
  $region1: #{tpu_custom_call.1} parent=0
    #allocation2 [shape = 'u8[6144]{0}', space=vmem, size = 0x1800, scoped, tag = 'input window, operand 0, single buffered']
    #allocation3 [shape = 's32[1]{0}', space=sflag, size = 0x4, scoped, tag = 'scoped memory for tpu_custom_call.1']
    #allocation4 [shape = 's32[1]{0}', space=sflag, size = 0x4, scoped, tag = 'scoped memory for tpu_custom_call.1']
    #allocation5 [shape = 'u8[65536]{0}', space=vmem, size = 0x10000, scoped, tag = 'input window, operand 1, single buffered']
    #allocation6 [shape = 's32[1]{0}', space=sflag, size = 0x4, scoped, tag = 'scoped memory for tpu_custom_call.1']
    #allocation7 [shape = 'u8[12288]{0}', space=vmem, size = 0x3000, scoped, tag = 'output window, operand 0, single buffered']
    %7 = vsyncpa [#allocation3], 0
    %8 = vsyncpa [#allocation6], 0
    %9 = vsyncpa [#allocation4], 0
    // Predicated region
    $region2: #{tpu_custom_call.1} parent=1 // pred_check
      _
    $region3: #{tpu_custom_call.1} parent=1 // pred_check_branch
      %11 = sbr.rel (0) target = $region5
    $region4: #{tpu_custom_call.1} parent=1 // pred_region
      %s13 = ssub.s32 192, 192
      %14 = vsyncadd [#allocation3], %s13
      %s15 = sshll.u32 [#allocation2], 4
      %s16 = int_to_ptr.vmem [resolvable:$true] %s15
      %21 = dma.hbm_to_vmem [thread:$0]  %s0, 192, %s16, [#allocation3], 64, 64, 4
    $region5: #{tpu_custom_call.1} parent=1 // pred_fallthru
      _
    // Predicated region
    $region6: #{tpu_custom_call.1} parent=1 // pred_check
      _
    $region7: #{tpu_custom_call.1} parent=1 // pred_check_branch
      %23 = sbr.rel (0) target = $region9
    $region8: #{tpu_custom_call.1} parent=1 // pred_region
      %s25 = ssub.s32 2048, 2048
      %26 = vsyncadd [#allocation6], %s25
      %s27 = sshll.u32 [#allocation5], 4
      %s28 = int_to_ptr.vmem [resolvable:$true] %s27
      %33 = dma.hbm_to_vmem [thread:$0]  %s1, 2048, %s28, [#allocation6], 64, 64, 4
    $region9: #{tpu_custom_call.1} parent=1 // pred_fallthru
      _
    // Predicated region
    $region10: #{tpu_custom_call.1} parent=1 // pred_check
      _
    $region11: #{tpu_custom_call.1} parent=1 // pred_check_branch
      %35 = sbr.rel (0) target = $region13
    $region12: #{tpu_custom_call.1} parent=1 // pred_region
      %36 = dma.done [#allocation3], 192
    $region13: #{tpu_custom_call.1} parent=1 // pred_fallthru
      _
    // Predicated region
    $region14: #{tpu_custom_call.1} parent=1 // pred_check
      _
    $region15: #{tpu_custom_call.1} parent=1 // pred_check_branch
      %38 = sbr.rel (0) target = $region17
    $region16: #{tpu_custom_call.1} parent=1 // pred_region
      %39 = dma.done [#allocation6], 2048
    $region17: #{tpu_custom_call.1} parent=1 // pred_fallthru
      _
    %v41 = vld [vmem:[#allocation2] sm:$0xf]
    %v42 = vld [vmem:[#allocation2 + $0x4] sm:$0xf]
    %v43 = vld [vmem:[#allocation2 + $0x8] sm:$0xf]
    %v44 = vld [vmem:[#allocation5] sm:$0xf]
    %v45 = vld [vmem:[#allocation5 + $0x4] sm:$0xf]
    %v46 = vld [vmem:[#allocation5 + $0x8] sm:$0xf]
    %v47 = vld [vmem:[#allocation5 + $0xc] sm:$0xf]
    %v48 = vld [vmem:[#allocation5 + $0x10] sm:$0xf]
    %v49 = vld [vmem:[#allocation5 + $0x14] sm:$0xf]
    %v50 = vld [vmem:[#allocation5 + $0x18] sm:$0xf]
    %v51 = vld [vmem:[#allocation5 + $0x1c] sm:$0xf]
    %v52 = vld [vmem:[#allocation5 + $0x20] sm:$0xf]
    %v53 = vld [vmem:[#allocation5 + $0x24] sm:$0xf]
    %v54 = vld [vmem:[#allocation5 + $0x28] sm:$0xf]
    %v55 = vld [vmem:[#allocation5 + $0x2c] sm:$0xf]
    %v56 = vld [vmem:[#allocation5 + $0x30] sm:$0xf]
    %v57 = vld [vmem:[#allocation5 + $0x34] sm:$0xf]
    %v58 = vld [vmem:[#allocation5 + $0x38] sm:$0xf]
    %v59 = vld [vmem:[#allocation5 + $0x3c] sm:$0xf]
    %v60 = vld [vmem:[#allocation5 + $0x40] sm:$0xf]
    %v61 = vld [vmem:[#allocation5 + $0x44] sm:$0xf]
    %v62 = vld [vmem:[#allocation5 + $0x48] sm:$0xf]
    %v63 = vld [vmem:[#allocation5 + $0x4c] sm:$0xf]
    %v64 = vld [vmem:[#allocation5 + $0x50] sm:$0xf]
    %v65 = vld [vmem:[#allocation5 + $0x54] sm:$0xf]
    %v66 = vld [vmem:[#allocation5 + $0x58] sm:$0xf]
    %v67 = vld [vmem:[#allocation5 + $0x5c] sm:$0xf]
    %v68 = vld [vmem:[#allocation5 + $0x60] sm:$0xf]
    %v69 = vld [vmem:[#allocation5 + $0x64] sm:$0xf]
    %v70 = vld [vmem:[#allocation5 + $0x68] sm:$0xf]
    %v71 = vld [vmem:[#allocation5 + $0x6c] sm:$0xf]
    %v72 = vld [vmem:[#allocation5 + $0x70] sm:$0xf]
    %v73 = vld [vmem:[#allocation5 + $0x74] sm:$0xf]
    %v74 = vld [vmem:[#allocation5 + $0x78] sm:$0xf]
    %v75 = vld [vmem:[#allocation5 + $0x7c] sm:$0xf]
    %v79 = vunpack.c.l.b16 %v41
    %v80 = vunpack.c.l.b16 %v42
    %v81 = vunpack.c.l.b16 %v43
    %v82 = vpack.c.b16 %v80, %v79
    %v83 = vpack.c.b16 %v81, %v81
    %v118 = vunpack.c.l.b16 %v44
    %v119 = vunpack.c.l.b16 %v45
    %v120 = vunpack.c.l.b16 %v46
    %v121 = vunpack.c.l.b16 %v47
    %v122 = vunpack.c.l.b16 %v48
    %v123 = vunpack.c.l.b16 %v49
    %v124 = vunpack.c.l.b16 %v50
    %v125 = vunpack.c.l.b16 %v51
    %v126 = vunpack.c.l.b16 %v52
    %v127 = vunpack.c.l.b16 %v53
    %v128 = vunpack.c.l.b16 %v54
    %v129 = vunpack.c.l.b16 %v55
    %v130 = vunpack.c.l.b16 %v56
    %v131 = vunpack.c.l.b16 %v57
    %v132 = vunpack.c.l.b16 %v58
    %v133 = vunpack.c.l.b16 %v59
    %v134 = vunpack.c.l.b16 %v60
    %v135 = vunpack.c.l.b16 %v61
    %v136 = vunpack.c.l.b16 %v62
    %v137 = vunpack.c.l.b16 %v63
    %v138 = vunpack.c.l.b16 %v64
    %v139 = vunpack.c.l.b16 %v65
    %v140 = vunpack.c.l.b16 %v66
    %v141 = vunpack.c.l.b16 %v67
    %v142 = vunpack.c.l.b16 %v68
    %v143 = vunpack.c.l.b16 %v69
    %v144 = vunpack.c.l.b16 %v70
    %v145 = vunpack.c.l.b16 %v71
    %v146 = vunpack.c.l.b16 %v72
    %v147 = vunpack.c.l.b16 %v73
    %v148 = vunpack.c.l.b16 %v74
    %v149 = vunpack.c.l.b16 %v75
    %v150 = vpack.c.b16 %v119, %v118
    %v151 = vpack.c.b16 %v121, %v120
    %v152 = vpack.c.b16 %v123, %v122
    %v153 = vpack.c.b16 %v125, %v124
    %v154 = vpack.c.b16 %v127, %v126
    %v155 = vpack.c.b16 %v129, %v128
    %v156 = vpack.c.b16 %v131, %v130
    %v157 = vpack.c.b16 %v133, %v132
    %v158 = vpack.c.b16 %v135, %v134
    %v159 = vpack.c.b16 %v137, %v136
    %v160 = vpack.c.b16 %v139, %v138
    %v161 = vpack.c.b16 %v141, %v140
    %v162 = vpack.c.b16 %v143, %v142
    %v163 = vpack.c.b16 %v145, %v144
    %v164 = vpack.c.b16 %v147, %v146
    %v165 = vpack.c.b16 %v149, %v148
    %182 = vmatprep.subr.bf16.mxu0 0
    %183 = vmatpush1.bf16.xpose.msra.mxu0 %v150
    %184 = vmatprep.subr.bf16.mxu0 0
    %185 = vmatpush1.bf16.xpose.msra.mxu0 %v151
    %186 = vmatprep.subr.bf16.mxu0 0
    %187 = vmatpush1.bf16.xpose.msra.mxu0 %v152
    %188 = vmatprep.subr.bf16.mxu0 0
    %189 = vmatpush1.bf16.xpose.msra.mxu0 %v153
    %190 = vmatprep.subr.bf16.mxu0 0
    %191 = vmatpush1.bf16.xpose.msra.mxu0 %v154
    %192 = vmatprep.subr.bf16.mxu0 0
    %193 = vmatpush1.bf16.xpose.msra.mxu0 %v155
    %194 = vmatprep.subr.bf16.mxu0 0
    %195 = vmatpush1.bf16.xpose.msra.mxu0 %v156
    %196 = vmatprep.subr.bf16.mxu0 0
    %197 = vmatpush1.bf16.xpose.msra.mxu0 %v157
    %198 = vmatprep.subr.bf16.mxu0 0
    %199 = vmatpush1.bf16.xpose.msra.mxu0 %v158
    %200 = vmatprep.subr.bf16.mxu0 0
    %201 = vmatpush1.bf16.xpose.msra.mxu0 %v159
    %202 = vmatprep.subr.bf16.mxu0 0
    %203 = vmatpush1.bf16.xpose.msra.mxu0 %v160
    %204 = vmatprep.subr.bf16.mxu0 0
    %205 = vmatpush1.bf16.xpose.msra.mxu0 %v161
    %206 = vmatprep.subr.bf16.mxu0 0
    %207 = vmatpush1.bf16.xpose.msra.mxu0 %v162
    %208 = vmatprep.subr.bf16.mxu0 0
    %209 = vmatpush1.bf16.xpose.msra.mxu0 %v163
    %210 = vmatprep.subr.bf16.mxu0 0
    %211 = vmatpush1.bf16.xpose.msra.mxu0 %v164
    %212 = vmatprep.subr.bf16.mxu0 0
    %213 = vmatpush1.bf16.xpose.msra.mxu0 %v165
    %214 = vmatprep.mubr.bf16.mxu0 0
    %215 = vmatmul.mubr.bf16.gmra.mrb[0].mxu0 %v82
    %v216 = vpop.f32.mrb[0].mxu0
    %v217 = vadd.f32 0.0, %v216
    %v218 = vpop.f32.mrb[0].mxu0
    %v219 = vadd.f32 0.0, %v218
    %v220 = vpop.f32.mrb[0].mxu0
    %v221 = vadd.f32 0.0, %v220
    %v222 = vpop.f32.mrb[0].mxu0
    %v223 = vadd.f32 0.0, %v222
    %224 = vmatprep.mubr.bf16.mxu0 0
    %225 = vmatmul.mubr.bf16.gmra.mrb[0].mxu0 %v83
    %v226 = vpop.f32.mrb[0].mxu0
    %v227 = vadd.f32 0.0, %v226
    %v228 = vpop.f32.mrb[0].mxu0
    %v229 = vadd.f32 0.0, %v228
    %v230 = vpop.f32.mrb[0].mxu0
    %v231 = vpop.f32.mrb[0].mxu0
    %232 = vdwg.mxu0
    %v233 = vmax.f32 %v217, %v219
    %v234 = vmax.f32 %v221, %v223
    %v235 = vmax.f32 %v227, %v229
    %236 = vst [vmem:[#allocation7] sm:$0xff] %v233
    %237 = vst [vmem:[#allocation7 + $0x8] sm:$0xff] %v234
    %238 = vst [vmem:[#allocation7 + $0x10] sm:$0xff] %v235
    // Predicated region
    $region18: #{tpu_custom_call.1} parent=1 // pred_check
      _
    $region19: #{tpu_custom_call.1} parent=1 // pred_check_branch
      %240 = sbr.rel (0) target = $region21
    $region20: #{tpu_custom_call.1} parent=1 // pred_region
      %s242 = ssub.s32 384, 384
      %243 = vsyncadd [#allocation4], %s242
      %s244 = sshll.u32 [#allocation7], 4
      %s245 = int_to_ptr.vmem [resolvable:$true] %s244
      %250 = dma.vmem_to_hbm [thread:$0]  %s245, 384, %s2, [#allocation4], 128, 128, 8
    $region21: #{tpu_custom_call.1} parent=1 // pred_fallthru
      _
    // Predicated region
    $region22: #{tpu_custom_call.1} parent=1 // pred_check
      _
    $region23: #{tpu_custom_call.1} parent=1 // pred_check_branch
      %252 = sbr.rel (0) target = $region25
    $region24: #{tpu_custom_call.1} parent=1 // pred_region
      %253 = dma.done [#allocation4], 384
    $region25: #{tpu_custom_call.1} parent=1 // pred_fallthru
      _
    %254 = vsyncpa [#allocation3], 1
    %255 = vsyncpa [#allocation6], 1
    %256 = vsyncpa [#allocation4], 1

</llo_original>
